<compile_context>
chip_gen: v6e
topology: v6e:2x2x1
jax: 0.10.0
libtpu: 0.0.40
codegen_flags: <defaults>
</compile_context>

<pallas_src>
import math

import jax
import jax.numpy as jnp
from jax.experimental import pallas as pl
from jax.experimental.pallas import tpu as pltpu


def _copy_block_kernel(x_ref, o_ref):
    # x_ref / o_ref: (block_rows, block_cols) VMEM tiles.
    o_ref[...] = x_ref[...]


def _choose_blocks(rows: int, cols: int, itemsize: int):
    """Pick (block_rows, block_cols) for a lane-dense 2D copy.

    Targets ~4 MiB per tile. Blocks are either the full dim (always legal)
    or a multiple of (8, 128) (legal; ragged boundary blocks are masked).
    """
    target_bytes = 4 * 1024 * 1024
    max_elems = max(8 * 128, target_bytes // max(itemsize, 1))

    # Lane dim first: as wide as possible (>=128-aligned), leaving room for
    # at least 8 sublanes.
    col_cap = max(128, ((max_elems // 8) // 128) * 128)
    if cols <= col_cap:
        block_cols = cols                      # full extent — legal as-is
    else:
        block_cols = col_cap                   # multiple of 128

    # Then rows: fill the remaining budget (>=8-aligned).
    row_budget = max(8, max_elems // max(block_cols, 1))
    row_cap = max(8, (row_budget // 8) * 8)
    if rows <= row_cap:
        block_rows = rows                      # full extent — legal as-is
    else:
        block_rows = row_cap                   # multiple of 8

    return block_rows, block_cols


def _pallas_copy_2d(x2d):
    """Materialized copy of a 2D array with large lane-dense blocks."""
    rows, cols = x2d.shape
    block_rows, block_cols = _choose_blocks(rows, cols, x2d.dtype.itemsize)

    grid = (pl.cdiv(rows, block_rows), pl.cdiv(cols, block_cols))

    return pl.pallas_call(
        _copy_block_kernel,
        out_shape=jax.ShapeDtypeStruct((rows, cols), x2d.dtype),
        grid=grid,
        in_specs=[
            pl.BlockSpec((block_rows, block_cols), lambda i, j: (i, j)),
        ],
        out_specs=pl.BlockSpec((block_rows, block_cols), lambda i, j: (i, j)),
        compiler_params=pltpu.CompilerParams(
            dimension_semantics=("parallel", "parallel"),
            vmem_limit_bytes=32 * 1024 * 1024,
        ),
    )(x2d)


def concater(x, *, force_copy=False):
    """Matches Concater.forward semantics exactly.

    Default path is a metadata-only jnp.reshape (zero data movement). Set
    force_copy=True to run the Pallas copy kernel instead (e.g. when a freshly
    materialized buffer is required).
    """
    if x.ndim == 4:
        g, c, h, w = x.shape
        out_shape = (g * c, h, w)
    elif x.ndim == 5:
        b, g, c, h, w = x.shape
        out_shape = (b, g * c, h, w)
    else:
        raise ValueError(f"Unsupported input shape: {x.shape}")

    if not force_copy:
        # Merging adjacent leading axes of a contiguous array is metadata-only.
        return jnp.reshape(x, out_shape)

    # Pallas copy path: flatten to a lane-dense 2D view (rows, h*w).
    rows = math.prod(x.shape[:-2])
    cols = x.shape[-2] * x.shape[-1]
    x2d = jnp.reshape(x, (rows, cols))          # metadata-only
    out2d = _pallas_copy_2d(x2d)                # the actual HBM copy
    return jnp.reshape(out2d, out_shape)        # metadata-only


if __name__ == "__main__":
    key = jax.random.PRNGKey(0)
    k4, k5, kspec, kbf = jax.random.split(key, 4)

    # 4D case: (g, c, h, w) -> (g*c, h, w)
    x4 = jax.random.normal(k4, (2, 4, 16, 16), dtype=jnp.float32)
    ref4 = jnp.reshape(x4, (2 * 4, 16, 16))
    out4_fast = jax.block_until_ready(concater(x4))
    out4_copy = jax.block_until_ready(concater(x4, force_copy=True))
    assert out4_fast.shape == (8, 16, 16) and out4_copy.shape == (8, 16, 16)
    assert out4_fast.dtype == x4.dtype and out4_copy.dtype == x4.dtype
    assert jnp.array_equal(out4_fast, ref4)
    assert jnp.array_equal(out4_copy, ref4)

    # 5D case: (b, g, c, h, w) -> (b, g*c, h, w)
    x5 = jax.random.normal(k5, (2, 2, 4, 16, 16), dtype=jnp.float32)
    ref5 = jnp.reshape(x5, (2, 2 * 4, 16, 16))
    out5_fast = jax.block_until_ready(concater(x5))
    out5_copy = jax.block_until_ready(concater(x5, force_copy=True))
    assert out5_fast.shape == (2, 8, 16, 16) and out5_copy.shape == (2, 8, 16, 16)
    assert jnp.array_equal(out5_fast, ref5)
    assert jnp.array_equal(out5_copy, ref5)

    # Spec shape (1, 31, 64, 64): non-multiple-of-8 rows (31) and lane width
    # 4096 — single full-extent block, no masking needed.
    xs = jax.random.normal(kspec, (1, 31, 64, 64), dtype=jnp.float32)
    refs = jnp.reshape(xs, (1 * 31, 64, 64))
    outs_copy = jax.block_until_ready(concater(xs, force_copy=True))
    assert outs_copy.shape == (31, 64, 64)
    assert jnp.array_equal(outs_copy, refs)

    # bf16 case exercises the dtype-adaptive block sizing.
    xb = jax.random.normal(kbf, (2, 4, 16, 16), dtype=jnp.bfloat16)
    refb = jnp.reshape(xb, (2 * 4, 16, 16))
    outb_copy = jax.block_until_ready(concater(xb, force_copy=True))
    assert outb_copy.dtype == jnp.bfloat16
    assert jnp.array_equal(outb_copy, refb)

    print("KERNEL_OK")
</pallas_src>

<mosaic_0001>
module attributes {stable_mosaic.version = 11 : i64} {
  func.func @_copy_block_kernel(%arg0: i32, %arg1: i32, %arg2: memref<8x256xf32, #tpu.memory_space<vmem>>, %arg3: memref<8x256xf32, #tpu.memory_space<vmem>>) attributes {dimension_semantics = [#tpu.dimension_semantics<parallel>, #tpu.dimension_semantics<parallel>], iteration_bounds = array<i64: 1, 1>, scalar_prefetch = 0 : i64, scratch_operands = 0 : i64, tpu.core_type = #tpu.core_type<tc>, window_params = [{transform_indices = @transform_0, window_bounds = array<i64: 8, 256>}, {transform_indices = @transform_1, window_bounds = array<i64: 8, 256>}]} {
    %c0 = arith.constant 0 : index
    %c0_0 = arith.constant 0 : index
    %0 = vector.load %arg2[%c0, %c0_0] : memref<8x256xf32, #tpu.memory_space<vmem>>, vector<8x256xf32>
    %c0_1 = arith.constant 0 : index
    %c0_2 = arith.constant 0 : index
    %1 = vector.load %arg3[%c0_1, %c0_2] : memref<8x256xf32, #tpu.memory_space<vmem>>, vector<8x256xf32>
    tpu.vector_store %arg3[%c0_1, %c0_2], %0 {strides = array<i32>} : memref<8x256xf32, #tpu.memory_space<vmem>>, vector<8x256xf32>,
    return
  }
  func.func @transform_0(%arg0: i32, %arg1: i32) -> (i32, i32) {
    %c0_i32 = arith.constant 0 : i32
    return %arg0, %arg1 : i32, i32
  }
  func.func @transform_1(%arg0: i32, %arg1: i32) -> (i32, i32) {
    %c0_i32 = arith.constant 0 : i32
    return %arg0, %arg1 : i32, i32
  }
}

</mosaic_0001>

<llo_original>
// kernel: tpu_custom_call.1
$region0: #{tpu_custom_call.1}
  #allocation0 [shape = 'u32[]', space=smem, size = 0x4, offset = 0x4, fixed_abs, tag = 'smem constant byte address 0x4 - core index']
  #allocation1 [shape = 'u32[144,128]{1,0:T(1,128)}', space=vmem, size = 0x12000, scoped, tag = 'internal scratch']
  %s0 = inlined_call_operand.hbm [shape: f32[8,256], index: 0, kind: input, shape index: {}]
  %s1 = inlined_call_operand.hbm [shape: f32[8,256], index: 1, kind: output, shape index: {}]
  %s2 = sld [smem:[#allocation0]]
  $region18: #{tpu_custom_call.1} parent=0
    _
  %s4 = ssub.s32 1, %s2
  %s5 = scalar_select 0, %s4, %s2
  $region1: #{tpu_custom_call.1} parent=0
    #allocation2 [shape = 'u8[8192]{0}', space=vmem, size = 0x2000, scoped, tag = 'input window, operand 0, single buffered']
    #allocation3 [shape = 's32[1]{0}', space=sflag, size = 0x4, scoped, tag = 'scoped memory for tpu_custom_call.1']
    #allocation4 [shape = 's32[1]{0}', space=sflag, size = 0x4, scoped, tag = 'scoped memory for tpu_custom_call.1']
    #allocation5 [shape = 'u8[8192]{0}', space=vmem, size = 0x2000, scoped, tag = 'output window, operand 0, single buffered']
    %6 = vsyncpa [#allocation3], 0
    %7 = vsyncpa [#allocation4], 0
    // Predicated region
    $region2: #{tpu_custom_call.1} parent=1 // pred_check
      _
    $region3: #{tpu_custom_call.1} parent=1 // pred_check_branch
      %9 = sbr.rel (0) target = $region5
    $region4: #{tpu_custom_call.1} parent=1 // pred_region
      %s11 = ssub.s32 256, 256
      %12 = vsyncadd [#allocation3], %s11
      %s14 = sshll.u32 [#allocation2], 4
      %s15 = int_to_ptr.vmem [resolvable:$true] %s14
      %17 = dma.hbm_to_vmem [thread:$0]  %s0, 256, %s15, [#allocation3]
    $region5: #{tpu_custom_call.1} parent=1 // pred_fallthru
      _
    // Predicated region
    $region6: #{tpu_custom_call.1} parent=1 // pred_check
      _
    $region7: #{tpu_custom_call.1} parent=1 // pred_check_branch
      %19 = sbr.rel (0) target = $region9
    $region8: #{tpu_custom_call.1} parent=1 // pred_region
      %20 = dma.done [#allocation3], 256
    $region9: #{tpu_custom_call.1} parent=1 // pred_fallthru
      _
    %v21 = vld [vmem:[#allocation2] sm:$0xff]
    %v22 = vld [vmem:[#allocation2 + $0x8] sm:$0xff]
    %23 = vst [vmem:[#allocation5] sm:$0xff] %v21
    %24 = vst [vmem:[#allocation5 + $0x8] sm:$0xff] %v22
    // Predicated region
    $region10: #{tpu_custom_call.1} parent=1 // pred_check
      _
    $region11: #{tpu_custom_call.1} parent=1 // pred_check_branch
      %26 = sbr.rel (0) target = $region13
    $region12: #{tpu_custom_call.1} parent=1 // pred_region
      %s28 = ssub.s32 256, 256
      %29 = vsyncadd [#allocation4], %s28
      %s31 = sshll.u32 [#allocation5], 4
      %s32 = int_to_ptr.vmem [resolvable:$true] %s31
      %34 = dma.vmem_to_hbm [thread:$0]  %s32, 256, %s1, [#allocation4]
    $region13: #{tpu_custom_call.1} parent=1 // pred_fallthru
      _
    // Predicated region
    $region14: #{tpu_custom_call.1} parent=1 // pred_check
      _
    $region15: #{tpu_custom_call.1} parent=1 // pred_check_branch
      %36 = sbr.rel (0) target = $region17
    $region16: #{tpu_custom_call.1} parent=1 // pred_region
      %37 = dma.done [#allocation4], 256
    $region17: #{tpu_custom_call.1} parent=1 // pred_fallthru
      _
    %38 = vsyncpa [#allocation3], 1
    %39 = vsyncpa [#allocation4], 1

</llo_original>
